<compile_context>
chip_gen: v7x
topology: tpu7x:2x2x1
jax: 0.10.0
libtpu: 0.0.40
codegen_flags: <defaults>
</compile_context>

<pallas_src>
import math

import jax
import jax.numpy as jnp
from jax.experimental import pallas as pl
from jax.experimental.pallas import tpu as pltpu

LN_EPS = 1e-5  # PyTorch nn.LayerNorm default


def _layernorm_f32(h, gamma, beta):
    """Two-pass LayerNorm over the last axis (f32 math, cancellation-safe)."""
    mu = jnp.mean(h, axis=-1, keepdims=True)
    c = h - mu
    var = jnp.mean(c * c, axis=-1, keepdims=True)
    inv = jax.lax.rsqrt(var + LN_EPS)
    return c * inv * gamma + beta


def projection_head_kernel(
    x_ref,    # (tm, E)   native dtype (f32 or bf16)
    w1_ref,   # (E, H)    H = 2 * projection_dim   (untiled, VMEM-resident)
    v1_ref,   # (3, H)    rows = [bias1, gamma1, beta1]
    w2_ref,   # (H, P)    P = projection_dim
    v2_ref,   # (3, P)    rows = [bias2, gamma2, beta2]
    o_ref,    # (tm, P)
):
    # Linear 1 — native dtype straight to the MXU, f32 accumulation.
    h = jnp.dot(x_ref[...], w1_ref[...], preferred_element_type=jnp.float32)

    v1 = v1_ref[...].astype(jnp.float32)
    h = h + v1[0:1, :]
    h = _layernorm_f32(h, v1[1:2, :], v1[2:3, :])

    # LeakyReLU(0.2): identical to where(h>=0, h, 0.2h) for positive slope,
    # but a single vmax on the VPU.
    h = jnp.maximum(h, 0.2 * h)

    # Dropout: identity (eval mode).
    # TODO(synk): training-mode dropout would need pltpu.prng_seed + prng_random_bits.

    # Linear 2 — N=P (128) half-fills a 256-wide MXU on v6e/v7x; non-binding for
    # this HBM/overhead-bound kernel, so keep the simple shape (no widening).
    y = jnp.dot(h.astype(w2_ref.dtype), w2_ref[...],
                preferred_element_type=jnp.float32)

    v2 = v2_ref[...].astype(jnp.float32)
    y = y + v2[0:1, :]
    y = _layernorm_f32(y, v2[1:2, :], v2[2:3, :])

    # P = 128 in the demo -> lane-aligned unmasked stores.
    # TODO(synk): for P < 128, repack output into a lane-dense (B*P/128, 128)
    # slab in the wrapper to avoid vst.msk partial stores.
    o_ref[...] = y.astype(o_ref.dtype)


def _tpu_config():
    """(multi_core, vmem_limit_bytes) from the local device kind (safe defaults)."""
    kind = ""
    try:
        kind = jax.devices()[0].device_kind.lower()
    except Exception:
        pass
    multi_core = "v7" in kind                     # v7x: 2 TensorCores / chip
    if multi_core:
        vmem_limit = 28 * 1024 * 1024             # v7x: 64 MiB physical VMEM
    elif any(g in kind for g in ("v2", "v3", "v4", "v5", "v6")):
        vmem_limit = 64 * 1024 * 1024             # 128 MiB physical VMEM
    else:
        vmem_limit = 32 * 1024 * 1024             # unknown: conservative
    return multi_core, vmem_limit


def _choose_tm(B, E, H, P, x_itemsize, out_itemsize, resident_bytes, *,
               multi_core, vmem_budget, max_tile=1024):
    """Generation-aware row-tile choice (see header comment)."""
    def fits(tm):
        per = 2 * tm * E * x_itemsize          # double-buffered x tile
        per += 2 * tm * P * out_itemsize       # double-buffered output tile
        per += tm * (H + P) * 4                # f32 intermediates h, y
        return resident_bytes + per <= vmem_budget

    pow2 = [d for d in (2048, 1024, 512, 256, 128, 64, 32, 16, 8)
            if d <= max_tile and d < B and B % d == 0]

    if multi_core:
        # v7x: largest tile giving an even number of grid steps (2, 4, ...),
        # so the CORE_PARALLEL axis balances across both TensorCores.
        for tm in pow2:
            if (B // tm) % 2 == 0 and fits(tm):
                return tm
    # Single TensorCore (v5e/v6e): whole batch in one step when it fits.
    if B <= max_tile and fits(B):
        return B
    for tm in pow2:
        if fits(tm):
            return tm
    return B  # fallback: block == full dim is always legal


def projection_head(x, params, *, tm=None):
    """x: (B, E). params = (w1, v1, w2, v2). Returns (B, P) in x.dtype."""
    B, E = x.shape
    w1, v1, w2, v2 = params
    H = w1.shape[1]
    P = w2.shape[1]

    multi_core, vmem_limit = _tpu_config()
    resident_bytes = sum(int(a.size) * a.dtype.itemsize for a in (w1, v1, w2, v2))
    if tm is None:
        tm = _choose_tm(B, E, H, P, x.dtype.itemsize, x.dtype.itemsize,
                        resident_bytes, multi_core=multi_core,
                        vmem_budget=int(vmem_limit * 0.85))
    assert B % tm == 0, "batch must be divisible by row tile"
    steps = B // tm
    grid = (steps,)

    if multi_core and steps >= 2 and steps % 2 == 0:
        axis_sem = getattr(pltpu, "CORE_PARALLEL", "parallel")
    else:
        axis_sem = "arbitrary"   # single TC: grid is a sequential loop anyway

    operands = (x, w1, v1, w2, v2)
    bytes_accessed = sum(int(a.size) * a.dtype.itemsize for a in operands)
    bytes_accessed += B * P * x.dtype.itemsize
    cost = pl.CostEstimate(
        flops=2 * B * (E * H + H * P),
        transcendentals=2 * B,                 # one rsqrt per LayerNorm per row
        bytes_accessed=bytes_accessed,
    )

    # Grid-invariant operands: untiled, VMEM-resident, no double-buffering.
    invariant = pl.BlockSpec(memory_space=pltpu.MemorySpace.VMEM)

    return pl.pallas_call(
        projection_head_kernel,
        out_shape=jax.ShapeDtypeStruct((B, P), x.dtype),
        grid_spec=pltpu.PrefetchScalarGridSpec(
            num_scalar_prefetch=0,
            grid=grid,
            in_specs=[pl.BlockSpec((tm, E), lambda i: (i, 0)),   # x row tiles
                      invariant, invariant, invariant, invariant],
            out_specs=pl.BlockSpec((tm, P), lambda i: (i, 0)),
        ),
        compiler_params=pltpu.CompilerParams(
            dimension_semantics=(axis_sem,),
            vmem_limit_bytes=vmem_limit),
        cost_estimate=cost,
    )(*operands)


def init_params(key, embedding_dim, projection_dim):
    """Deterministic init mirroring ProjectionHead._init_weights.

    PyTorch Linear weight is (out, in); we store (in, out) = its transpose.
    The bias / LayerNorm vectors are packed: v1 = [b1; g1; be1] (3, H),
    v2 = [b2; g2; be2] (3, P).
    """
    H = projection_dim * 2
    P = projection_dim
    k1, k2 = jax.random.split(key)

    # Linear1: kaiming_normal_(mode='fan_out', nonlinearity='leaky_relu', a=0)
    # fan_out of torch weight (H, E) is H; gain = sqrt(2 / (1 + 0^2)) = sqrt(2)
    std1 = math.sqrt(2.0) / math.sqrt(H)
    w1 = std1 * jax.random.normal(k1, (embedding_dim, H), jnp.float32)
    v1 = jnp.stack([jnp.zeros((H,), jnp.float32),    # bias1 = 0
                    jnp.ones((H,), jnp.float32),     # gamma1 = 1
                    jnp.zeros((H,), jnp.float32)])   # beta1 = 0

    # Linear2: xavier_uniform_ -> bound = sqrt(6 / (fan_in + fan_out))
    bound2 = math.sqrt(6.0 / (H + P))
    w2 = jax.random.uniform(k2, (H, P), jnp.float32, -bound2, bound2)
    v2 = jnp.stack([jnp.zeros((P,), jnp.float32),
                    jnp.ones((P,), jnp.float32),
                    jnp.zeros((P,), jnp.float32)])

    return (w1, v1, w2, v2)


def reference(x, params):
    """Pure-JAX reference of the same forward (eval mode)."""
    w1, v1, w2, v2 = params
    b1, g1, be1 = v1[0], v1[1], v1[2]
    b2, g2, be2 = v2[0], v2[1], v2[2]
    x = x.astype(jnp.float32)
    h = x @ w1.astype(jnp.float32) + b1
    mu = h.mean(-1, keepdims=True)
    var = ((h - mu) ** 2).mean(-1, keepdims=True)
    h = (h - mu) / jnp.sqrt(var + LN_EPS) * g1 + be1
    h = jnp.where(h >= 0, h, 0.2 * h)
    y = h @ w2.astype(jnp.float32) + b2
    mu = y.mean(-1, keepdims=True)
    var = ((y - mu) ** 2).mean(-1, keepdims=True)
    y = (y - mu) / jnp.sqrt(var + LN_EPS) * g2 + be2
    return y


if __name__ == "__main__":
    key = jax.random.PRNGKey(0)
    kx, kp = jax.random.split(key)

    batch = 64
    embedding_dim = 256
    projection_dim = 128   # hidden = 256, output = 128 (lane-aligned)

    x = jax.random.normal(kx, (batch, embedding_dim), jnp.float32)
    params = init_params(kp, embedding_dim, projection_dim)

    # f32 path: tm auto-selects (full batch on v5e/v6e, 2 core-parallel steps on v7x).
    out = jax.block_until_ready(projection_head(x, params))
    ref = reference(x, params)
    assert out.shape == (batch, projection_dim)
    assert jnp.allclose(out, ref, atol=5e-4, rtol=5e-4), "f32 mismatch vs reference"

    # bf16 MXU path: activations + matmul weights bf16 (cast upstream), bias/LN f32.
    w1, v1, w2, v2 = params
    params_bf16 = (w1.astype(jnp.bfloat16), v1, w2.astype(jnp.bfloat16), v2)
    out_bf16 = jax.block_until_ready(
        projection_head(x.astype(jnp.bfloat16), params_bf16))
    assert out_bf16.dtype == jnp.bfloat16
    assert jnp.allclose(out_bf16.astype(jnp.float32), ref, atol=1e-1, rtol=1e-1), \
        "bf16 mismatch vs reference"

    print("KERNEL_OK")
</pallas_src>

<mosaic_0001>
module attributes {stable_mosaic.version = 11 : i64} {
  func.func @projection_head_kernel(%arg0: i32, %arg1: memref<64x256xf32, #tpu.memory_space<vmem>>, %arg2: memref<256x256xf32, #tpu.memory_space<vmem>>, %arg3: memref<3x256xf32, #tpu.memory_space<vmem>>, %arg4: memref<256x128xf32, #tpu.memory_space<vmem>>, %arg5: memref<3x128xf32, #tpu.memory_space<vmem>>, %arg6: memref<64x128xf32, #tpu.memory_space<vmem>>) attributes {dimension_semantics = [#tpu.dimension_semantics<arbitrary>], iteration_bounds = array<i64: 1>, scalar_prefetch = 0 : i64, scratch_operands = 0 : i64, tpu.core_type = #tpu.core_type<tc>, window_params = [{transform_indices = @transform_0, window_bounds = array<i64: 64, 256>}, {pipeline_mode = #tpu.pipeline_mode<synchronous>, transform_indices = @transform_1, window_bounds = array<i64: 256, 256>}, {pipeline_mode = #tpu.pipeline_mode<synchronous>, transform_indices = @transform_2, window_bounds = array<i64: 3, 256>}, {pipeline_mode = #tpu.pipeline_mode<synchronous>, transform_indices = @transform_3, window_bounds = array<i64: 256, 128>}, {pipeline_mode = #tpu.pipeline_mode<synchronous>, transform_indices = @transform_4, window_bounds = array<i64: 3, 128>}, {transform_indices = @transform_5, window_bounds = array<i64: 64, 128>}]} {
    %c0 = arith.constant 0 : index
    %c0_0 = arith.constant 0 : index
    %0 = vector.load %arg1[%c0, %c0_0] : memref<64x256xf32, #tpu.memory_space<vmem>>, vector<64x256xf32>
    %c0_1 = arith.constant 0 : index
    %c0_2 = arith.constant 0 : index
    %1 = vector.load %arg2[%c0_1, %c0_2] : memref<256x256xf32, #tpu.memory_space<vmem>>, vector<256x256xf32>
    %cst = arith.constant dense<0.000000e+00> : vector<64x256xf32>
    %2 = tpu.matmul %0, %1, %cst {dimension_numbers = #tpu.dot_dimension_numbers<[1], [0], [0], [1], [0, 0, 1, 1], [], []>} : vector<64x256xf32>, vector<256x256xf32>, vector<64x256xf32> -> vector<64x256xf32>
    %c0_3 = arith.constant 0 : index
    %c0_4 = arith.constant 0 : index
    %3 = vector.load %arg3[%c0_3, %c0_4] : memref<3x256xf32, #tpu.memory_space<vmem>>, vector<3x256xf32>
    %4 = vector.extract_strided_slice %3 {offsets = [0, 0], sizes = [1, 256], strides = [1, 1]} : vector<3x256xf32> to vector<1x256xf32>
    %5 = vector.broadcast %4 : vector<1x256xf32> to vector<64x256xf32>
    %6 = arith.addf %2, %5 : vector<64x256xf32>
    %7 = vector.extract_strided_slice %3 {offsets = [1, 0], sizes = [1, 256], strides = [1, 1]} : vector<3x256xf32> to vector<1x256xf32>
    %8 = vector.extract_strided_slice %3 {offsets = [2, 0], sizes = [1, 256], strides = [1, 1]} : vector<3x256xf32> to vector<1x256xf32>
    %cst_5 = arith.constant dense<0.000000e+00> : vector<64xf32>
    %9 = vector.multi_reduction <add>, %6, %cst_5 [1] : vector<64x256xf32> to vector<64xf32>
    %10 = vector.shape_cast %9 : vector<64xf32> to vector<64x1xf32>
    %cst_6 = arith.constant 2.560000e+02 : f32
    %11 = vector.broadcast %cst_6 : f32 to vector<64x1xf32>
    %12 = arith.divf %10, %11 : vector<64x1xf32>
    %13 = vector.broadcast %12 : vector<64x1xf32> to vector<64x256xf32>
    %14 = arith.subf %6, %13 : vector<64x256xf32>
    %15 = arith.mulf %14, %14 : vector<64x256xf32>
    %cst_7 = arith.constant dense<0.000000e+00> : vector<64xf32>
    %16 = vector.multi_reduction <add>, %15, %cst_7 [1] : vector<64x256xf32> to vector<64xf32>
    %17 = vector.shape_cast %16 : vector<64xf32> to vector<64x1xf32>
    %cst_8 = arith.constant 2.560000e+02 : f32
    %18 = vector.broadcast %cst_8 : f32 to vector<64x1xf32>
    %19 = arith.divf %17, %18 : vector<64x1xf32>
    %cst_9 = arith.constant 9.99999974E-6 : f32
    %20 = vector.broadcast %cst_9 : f32 to vector<64x1xf32>
    %21 = arith.addf %19, %20 : vector<64x1xf32>
    %22 = math.rsqrt %21 : vector<64x1xf32>
    %23 = vector.broadcast %22 : vector<64x1xf32> to vector<64x256xf32>
    %24 = arith.mulf %14, %23 : vector<64x256xf32>
    %25 = vector.broadcast %7 : vector<1x256xf32> to vector<64x256xf32>
    %26 = arith.mulf %24, %25 : vector<64x256xf32>
    %27 = vector.broadcast %8 : vector<1x256xf32> to vector<64x256xf32>
    %28 = arith.addf %26, %27 : vector<64x256xf32>
    %cst_10 = arith.constant 2.000000e-01 : f32
    %29 = vector.broadcast %cst_10 : f32 to vector<64x256xf32>
    %30 = arith.mulf %29, %28 : vector<64x256xf32>
    %31 = arith.maximumf %28, %30 : vector<64x256xf32>
    %c0_11 = arith.constant 0 : index
    %c0_12 = arith.constant 0 : index
    %32 = vector.load %arg4[%c0_11, %c0_12] : memref<256x128xf32, #tpu.memory_space<vmem>>, vector<256x128xf32>
    %cst_13 = arith.constant dense<0.000000e+00> : vector<64x128xf32>
    %33 = tpu.matmul %31, %32, %cst_13 {dimension_numbers = #tpu.dot_dimension_numbers<[1], [0], [0], [1], [0, 0, 1, 1], [], []>} : vector<64x256xf32>, vector<256x128xf32>, vector<64x128xf32> -> vector<64x128xf32>
    %c0_14 = arith.constant 0 : index
    %c0_15 = arith.constant 0 : index
    %34 = vector.load %arg5[%c0_14, %c0_15] : memref<3x128xf32, #tpu.memory_space<vmem>>, vector<3x128xf32>
    %35 = vector.extract_strided_slice %34 {offsets = [0, 0], sizes = [1, 128], strides = [1, 1]} : vector<3x128xf32> to vector<1x128xf32>
    %36 = vector.broadcast %35 : vector<1x128xf32> to vector<64x128xf32>
    %37 = arith.addf %33, %36 : vector<64x128xf32>
    %38 = vector.extract_strided_slice %34 {offsets = [1, 0], sizes = [1, 128], strides = [1, 1]} : vector<3x128xf32> to vector<1x128xf32>
    %39 = vector.extract_strided_slice %34 {offsets = [2, 0], sizes = [1, 128], strides = [1, 1]} : vector<3x128xf32> to vector<1x128xf32>
    %cst_16 = arith.constant dense<0.000000e+00> : vector<64xf32>
    %40 = vector.multi_reduction <add>, %37, %cst_16 [1] : vector<64x128xf32> to vector<64xf32>
    %41 = vector.shape_cast %40 : vector<64xf32> to vector<64x1xf32>
    %cst_17 = arith.constant 1.280000e+02 : f32
    %42 = vector.broadcast %cst_17 : f32 to vector<64x1xf32>
    %43 = arith.divf %41, %42 : vector<64x1xf32>
    %44 = vector.broadcast %43 : vector<64x1xf32> to vector<64x128xf32>
    %45 = arith.subf %37, %44 : vector<64x128xf32>
    %46 = arith.mulf %45, %45 : vector<64x128xf32>
    %cst_18 = arith.constant dense<0.000000e+00> : vector<64xf32>
    %47 = vector.multi_reduction <add>, %46, %cst_18 [1] : vector<64x128xf32> to vector<64xf32>
    %48 = vector.shape_cast %47 : vector<64xf32> to vector<64x1xf32>
    %cst_19 = arith.constant 1.280000e+02 : f32
    %49 = vector.broadcast %cst_19 : f32 to vector<64x1xf32>
    %50 = arith.divf %48, %49 : vector<64x1xf32>
    %cst_20 = arith.constant 9.99999974E-6 : f32
    %51 = vector.broadcast %cst_20 : f32 to vector<64x1xf32>
    %52 = arith.addf %50, %51 : vector<64x1xf32>
    %53 = math.rsqrt %52 : vector<64x1xf32>
    %54 = vector.broadcast %53 : vector<64x1xf32> to vector<64x128xf32>
    %55 = arith.mulf %45, %54 : vector<64x128xf32>
    %56 = vector.broadcast %38 : vector<1x128xf32> to vector<64x128xf32>
    %57 = arith.mulf %55, %56 : vector<64x128xf32>
    %58 = vector.broadcast %39 : vector<1x128xf32> to vector<64x128xf32>
    %59 = arith.addf %57, %58 : vector<64x128xf32>
    %c0_21 = arith.constant 0 : index
    %c0_22 = arith.constant 0 : index
    %60 = vector.load %arg6[%c0_21, %c0_22] : memref<64x128xf32, #tpu.memory_space<vmem>>, vector<64x128xf32>
    tpu.vector_store %arg6[%c0_21, %c0_22], %59 {strides = array<i32>} : memref<64x128xf32, #tpu.memory_space<vmem>>, vector<64x128xf32>,
    return
  }
  func.func @transform_0(%arg0: i32) -> (i32, i32) {
    %c0_i32 = arith.constant 0 : i32
    %c0_i32_0 = arith.constant 0 : i32
    return %arg0, %c0_i32 : i32, i32
  }
  func.func @transform_1(%arg0: i32) -> (i32, i32) {
    %c0_i32 = arith.constant 0 : i32
    %c0_i32_0 = arith.constant 0 : i32
    %c0_i32_1 = arith.constant 0 : i32
    return %c0_i32, %c0_i32_0 : i32, i32
  }
  func.func @transform_2(%arg0: i32) -> (i32, i32) {
    %c0_i32 = arith.constant 0 : i32
    %c0_i32_0 = arith.constant 0 : i32
    %c0_i32_1 = arith.constant 0 : i32
    return %c0_i32, %c0_i32_0 : i32, i32
  }
  func.func @transform_3(%arg0: i32) -> (i32, i32) {
    %c0_i32 = arith.constant 0 : i32
    %c0_i32_0 = arith.constant 0 : i32
    %c0_i32_1 = arith.constant 0 : i32
    return %c0_i32, %c0_i32_0 : i32, i32
  }
  func.func @transform_4(%arg0: i32) -> (i32, i32) {
    %c0_i32 = arith.constant 0 : i32
    %c0_i32_0 = arith.constant 0 : i32
    %c0_i32_1 = arith.constant 0 : i32
    return %c0_i32, %c0_i32_0 : i32, i32
  }
  func.func @transform_5(%arg0: i32) -> (i32, i32) {
    %c0_i32 = arith.constant 0 : i32
    %c0_i32_0 = arith.constant 0 : i32
    return %arg0, %c0_i32 : i32, i32
  }
}

</mosaic_0001>

<llo_original>
// kernel: tpu_custom_call.1
$region0: #{tpu_custom_call.1}
  #allocation0 [shape = 'u32[]', space=smem, size = 0x4, offset = 0x4, fixed_abs, tag = 'smem constant byte address 0x4 - core index']
  #allocation1 [shape = 'u32[144,128]{1,0:T(1,128)}', space=vmem, size = 0x12000, scoped, tag = 'internal scratch']
  %s0 = inlined_call_operand.hbm [shape: f32[64,256], index: 0, kind: input, shape index: {}]
  %s1 = inlined_call_operand.hbm [shape: f32[256,256], index: 1, kind: input, shape index: {}]
  %s2 = inlined_call_operand.hbm [shape: f32[3,256], index: 2, kind: input, shape index: {}]
  %s3 = inlined_call_operand.hbm [shape: f32[256,128], index: 3, kind: input, shape index: {}]
  %s4 = inlined_call_operand.vmem [shape: f32[3,128], index: 4, kind: input, shape index: {}]
  %s5 = inlined_call_operand.hbm [shape: f32[64,128], index: 5, kind: output, shape index: {}]
  %s6 = sld [smem:[#allocation0]]
  $region46: #{tpu_custom_call.1} parent=0
    _
  %s8 = ssub.s32 1, %s6
  %s9 = scalar_select 0, %s8, %s6
  $region1: #{tpu_custom_call.1} parent=0
    #allocation2 [shape = 'u8[65536]{0}', space=vmem, size = 0x10000, scoped, tag = 'input window, operand 0, single buffered']
    #allocation3 [shape = 's32[1]{0}', space=sflag, size = 0x4, scoped, tag = 'scoped memory for tpu_custom_call.1']
    #allocation4 [shape = 's32[1]{0}', space=sflag, size = 0x4, scoped, tag = 'scoped memory for tpu_custom_call.1']
    #allocation5 [shape = 'u8[262144]{0}', space=vmem, size = 0x40000, scoped, tag = 'input window, operand 1, single buffered']
    #allocation6 [shape = 's32[1]{0}', space=sflag, size = 0x4, scoped, tag = 'scoped memory for tpu_custom_call.1']
    #allocation7 [shape = 'u8[4096]{0}', space=vmem, size = 0x1000, scoped, tag = 'input window, operand 2, single buffered']
    #allocation8 [shape = 'u8[131072]{0}', space=vmem, size = 0x20000, scoped, tag = 'input window, operand 3, single buffered']
    #allocation9 [shape = 's32[1]{0}', space=sflag, size = 0x4, scoped, tag = 'scoped memory for tpu_custom_call.1']
    #allocation10 [shape = 'u8[32768]{0}', space=vmem, size = 0x8000, scoped, tag = 'output window, operand 0, single buffered']
    %10 = vsyncpa [#allocation3], 0
    %11 = vsyncpa [#allocation6], 0
    %12 = vsyncpa [#allocation9], 0
    %13 = vsyncpa [#allocation4], 0
    // Predicated region
    $region2: #{tpu_custom_call.1} parent=1 // pred_check
      _
    $region3: #{tpu_custom_call.1} parent=1 // pred_check_branch
      %15 = sbr.rel (0) target = $region5
    $region4: #{tpu_custom_call.1} parent=1 // pred_region
      %s17 = ssub.s32 2048, 2048
      %18 = vsyncadd [#allocation3], %s17
      %s19 = sshll.u32 [#allocation2], 4
      %s20 = int_to_ptr.vmem [resolvable:$true] %s19
      %25 = dma.hbm_to_vmem [thread:$0]  %s0, 2048, %s20, [#allocation3], 256, 256, 16
    $region5: #{tpu_custom_call.1} parent=1 // pred_fallthru
      _
    // Predicated region
    $region6: #{tpu_custom_call.1} parent=1 // pred_check
      _
    $region7: #{tpu_custom_call.1} parent=1 // pred_check_branch
      %27 = sbr.rel (0) target = $region9
    $region8: #{tpu_custom_call.1} parent=1 // pred_region
      %s29 = ssub.s32 8192, 8192
      %30 = vsyncadd [#allocation6], %s29
      %s31 = sshll.u32 [#allocation5], 4
      %s32 = int_to_ptr.vmem [resolvable:$true] %s31
      %37 = dma.hbm_to_vmem [thread:$0]  %s1, 8192, %s32, [#allocation6], 256, 256, 16
    $region9: #{tpu_custom_call.1} parent=1 // pred_fallthru
      _
    // Predicated region
    $region10: #{tpu_custom_call.1} parent=1 // pred_check
      _
    $region11: #{tpu_custom_call.1} parent=1 // pred_check_branch
      %39 = sbr.rel (0) target = $region13
    $region12: #{tpu_custom_call.1} parent=1 // pred_region
      %s41 = ssub.s32 128, 128
      %42 = vsyncadd [#allocation6], %s41
      %s44 = sshll.u32 [#allocation7], 4
      %s45 = int_to_ptr.vmem [resolvable:$true] %s44
      %47 = dma.hbm_to_vmem [thread:$0]  %s2, 128, %s45, [#allocation6]
    $region13: #{tpu_custom_call.1} parent=1 // pred_fallthru
      _
    // Predicated region
    $region14: #{tpu_custom_call.1} parent=1 // pred_check
      _
    $region15: #{tpu_custom_call.1} parent=1 // pred_check_branch
      %49 = sbr.rel (0) target = $region17
    $region16: #{tpu_custom_call.1} parent=1 // pred_region
      %s51 = ssub.s32 4096, 4096
      %52 = vsyncadd [#allocation9], %s51
      %s53 = sshll.u32 [#allocation8], 4
      %s54 = int_to_ptr.vmem [resolvable:$true] %s53
      %59 = dma.hbm_to_vmem [thread:$0]  %s3, 4096, %s54, [#allocation9], 128, 128, 8
    $region17: #{tpu_custom_call.1} parent=1 // pred_fallthru
      _
    // Predicated region
    $region18: #{tpu_custom_call.1} parent=1 // pred_check
      _
    $region19: #{tpu_custom_call.1} parent=1 // pred_check_branch
      %61 = sbr.rel (0) target = $region21
    $region20: #{tpu_custom_call.1} parent=1 // pred_region
      _
    $region21: #{tpu_custom_call.1} parent=1 // pred_fallthru
      _
    // Predicated region
    $region22: #{tpu_custom_call.1} parent=1 // pred_check
      _
    $region23: #{tpu_custom_call.1} parent=1 // pred_check_branch
      %63 = sbr.rel (0) target = $region25
    $region24: #{tpu_custom_call.1} parent=1 // pred_region
      %64 = dma.done [#allocation3], 2048
    $region25: #{tpu_custom_call.1} parent=1 // pred_fallthru
      _
    // Predicated region
    $region26: #{tpu_custom_call.1} parent=1 // pred_check
      _
    $region27: #{tpu_custom_call.1} parent=1 // pred_check_branch
      %66 = sbr.rel (0) target = $region29
    $region28: #{tpu_custom_call.1} parent=1 // pred_region
      %67 = dma.done [#allocation6], 8192
    $region29: #{tpu_custom_call.1} parent=1 // pred_fallthru
      _
    // Predicated region
    $region30: #{tpu_custom_call.1} parent=1 // pred_check
      _
    $region31: #{tpu_custom_call.1} parent=1 // pred_check_branch
      %69 = sbr.rel (0) target = $region33
    $region32: #{tpu_custom_call.1} parent=1 // pred_region
      %70 = dma.done [#allocation6], 128
    $region33: #{tpu_custom_call.1} parent=1 // pred_fallthru
      _
    // Predicated region
    $region34: #{tpu_custom_call.1} parent=1 // pred_check
      _
    $region35: #{tpu_custom_call.1} parent=1 // pred_check_branch
      %72 = sbr.rel (0) target = $region37
    $region36: #{tpu_custom_call.1} parent=1 // pred_region
      %73 = dma.done [#allocation9], 4096
    $region37: #{tpu_custom_call.1} parent=1 // pred_fallthru
      _
    %v74 = vld [vmem:[#allocation2] sm:$0xff]
    %v75 = vld [vmem:[#allocation2 + $0x8] sm:$0xff]
    %v76 = vld [vmem:[#allocation2 + $0x10] sm:$0xff]
    %v77 = vld [vmem:[#allocation2 + $0x18] sm:$0xff]
    %v78 = vld [vmem:[#allocation2 + $0x20] sm:$0xff]
    %v79 = vld [vmem:[#allocation2 + $0x28] sm:$0xff]
    %v80 = vld [vmem:[#allocation2 + $0x30] sm:$0xff]
    %v81 = vld [vmem:[#allocation2 + $0x38] sm:$0xff]
    %v82 = vld [vmem:[#allocation2 + $0x40] sm:$0xff]
    %v83 = vld [vmem:[#allocation2 + $0x48] sm:$0xff]
    %v84 = vld [vmem:[#allocation2 + $0x50] sm:$0xff]
    %v85 = vld [vmem:[#allocation2 + $0x58] sm:$0xff]
    %v86 = vld [vmem:[#allocation2 + $0x60] sm:$0xff]
    %v87 = vld [vmem:[#allocation2 + $0x68] sm:$0xff]
    %v88 = vld [vmem:[#allocation2 + $0x70] sm:$0xff]
    %v89 = vld [vmem:[#allocation2 + $0x78] sm:$0xff]
    %v90 = vld [vmem:[#allocation5] sm:$0xff]
    %v91 = vld [vmem:[#allocation5 + $0x8] sm:$0xff]
    %v92 = vld [vmem:[#allocation5 + $0x10] sm:$0xff]
    %v93 = vld [vmem:[#allocation5 + $0x18] sm:$0xff]
    %v94 = vld [vmem:[#allocation5 + $0x20] sm:$0xff]
    %v95 = vld [vmem:[#allocation5 + $0x28] sm:$0xff]
    %v96 = vld [vmem:[#allocation5 + $0x30] sm:$0xff]
    %v97 = vld [vmem:[#allocation5 + $0x38] sm:$0xff]
    %v98 = vld [vmem:[#allocation5 + $0x40] sm:$0xff]
    %v99 = vld [vmem:[#allocation5 + $0x48] sm:$0xff]
    %v100 = vld [vmem:[#allocation5 + $0x50] sm:$0xff]
    %v101 = vld [vmem:[#allocation5 + $0x58] sm:$0xff]
    %v102 = vld [vmem:[#allocation5 + $0x60] sm:$0xff]
    %v103 = vld [vmem:[#allocation5 + $0x68] sm:$0xff]
    %v104 = vld [vmem:[#allocation5 + $0x70] sm:$0xff]
    %v105 = vld [vmem:[#allocation5 + $0x78] sm:$0xff]
    %v106 = vld [vmem:[#allocation5 + $0x80] sm:$0xff]
    %v107 = vld [vmem:[#allocation5 + $0x88] sm:$0xff]
    %v108 = vld [vmem:[#allocation5 + $0x90] sm:$0xff]
    %v109 = vld [vmem:[#allocation5 + $0x98] sm:$0xff]
    %v110 = vld [vmem:[#allocation5 + $0xa0] sm:$0xff]
    %v111 = vld [vmem:[#allocation5 + $0xa8] sm:$0xff]
    %v112 = vld [vmem:[#allocation5 + $0xb0] sm:$0xff]
    %v113 = vld [vmem:[#allocation5 + $0xb8] sm:$0xff]
    %v114 = vld [vmem:[#allocation5 + $0xc0] sm:$0xff]
    %v115 = vld [vmem:[#allocation5 + $0xc8] sm:$0xff]
    %v116 = vld [vmem:[#allocation5 + $0xd0] sm:$0xff]
    %v117 = vld [vmem:[#allocation5 + $0xd8] sm:$0xff]
    %v118 = vld [vmem:[#allocation5 + $0xe0] sm:$0xff]
    %v119 = vld [vmem:[#allocation5 + $0xe8] sm:$0xff]
    %v120 = vld [vmem:[#allocation5 + $0xf0] sm:$0xff]
    %v121 = vld [vmem:[#allocation5 + $0xf8] sm:$0xff]
    %v122 = vld [vmem:[#allocation5 + $0x100] sm:$0xff]
    %v123 = vld [vmem:[#allocation5 + $0x108] sm:$0xff]
    %v124 = vld [vmem:[#allocation5 + $0x110] sm:$0xff]
    %v125 = vld [vmem:[#allocation5 + $0x118] sm:$0xff]
    %v126 = vld [vmem:[#allocation5 + $0x120] sm:$0xff]
    %v127 = vld [vmem:[#allocation5 + $0x128] sm:$0xff]
    %v128 = vld [vmem:[#allocation5 + $0x130] sm:$0xff]
    %v129 = vld [vmem:[#allocation5 + $0x138] sm:$0xff]
    %v130 = vld [vmem:[#allocation5 + $0x140] sm:$0xff]
    %v131 = vld [vmem:[#allocation5 + $0x148] sm:$0xff]
    %v132 = vld [vmem:[#allocation5 + $0x150] sm:$0xff]
    %v133 = vld [vmem:[#allocation5 + $0x158] sm:$0xff]
    %v134 = vld [vmem:[#allocation5 + $0x160] sm:$0xff]
    %v135 = vld [vmem:[#allocation5 + $0x168] sm:$0xff]
    %v136 = vld [vmem:[#allocation5 + $0x170] sm:$0xff]
    %v137 = vld [vmem:[#allocation5 + $0x178] sm:$0xff]
    %v138 = vld [vmem:[#allocation5 + $0x180] sm:$0xff]
    %v139 = vld [vmem:[#allocation5 + $0x188] sm:$0xff]
    %v140 = vld [vmem:[#allocation5 + $0x190] sm:$0xff]
    %v141 = vld [vmem:[#allocation5 + $0x198] sm:$0xff]
    %v142 = vld [vmem:[#allocation5 + $0x1a0] sm:$0xff]
    %v143 = vld [vmem:[#allocation5 + $0x1a8] sm:$0xff]
    %v144 = vld [vmem:[#allocation5 + $0x1b0] sm:$0xff]
    %v145 = vld [vmem:[#allocation5 + $0x1b8] sm:$0xff]
    %v146 = vld [vmem:[#allocation5 + $0x1c0] sm:$0xff]
    %v147 = vld [vmem:[#allocation5 + $0x1c8] sm:$0xff]
    %v148 = vld [vmem:[#allocation5 + $0x1d0] sm:$0xff]
    %v149 = vld [vmem:[#allocation5 + $0x1d8] sm:$0xff]
    %v150 = vld [vmem:[#allocation5 + $0x1e0] sm:$0xff]
    %v151 = vld [vmem:[#allocation5 + $0x1e8] sm:$0xff]
    %v152 = vld [vmem:[#allocation5 + $0x1f0] sm:$0xff]
    %v153 = vld [vmem:[#allocation5 + $0x1f8] sm:$0xff]
    %v154 = vld [vmem:[#allocation7] sm:$0x77]
    %v156 = vlaneseq
    %v157 = vshrl.u32 %v156, 7
    %v158 = vsub.s32 0, %v157
    %v159 = vrot.slane %v154, %v158
    %v160 = vlaneseq
    %v161 = vshrl.u32 %v160, 7
    %v162 = vsub.s32 4, %v161
    %v163 = vrot.slane %v154, %v162
    %v166 = vlaneseq
    %v167 = vshrl.u32 %v166, 7
    %v168 = vsub.s32 0, %v167
    %v169 = vrot.slane %v159, %v168
    %v170 = vlaneseq
    %v171 = vshrl.u32 %v170, 7
    %v172 = vsub.s32 0, %v171
    %v173 = vrot.slane %v163, %v172
    %174 = vmatprep.subr.mxu0 %v91
    %175 = vmatpush1.msra.mxu0 %v90
    %176 = vmatprep.subr.mxu0 %v93
    %177 = vmatpush1.msra.mxu0 %v92
    %178 = vmatprep.subr.mxu0 %v95
    %179 = vmatpush1.msra.mxu0 %v94
    %180 = vmatprep.subr.mxu0 %v97
    %181 = vmatpush1.msra.mxu0 %v96
    %182 = vmatprep.subr.mxu0 %v99
    %183 = vmatpush1.msra.mxu0 %v98
    %184 = vmatprep.subr.mxu0 %v101
    %185 = vmatpush1.msra.mxu0 %v100
    %186 = vmatprep.subr.mxu0 %v103
    %187 = vmatpush1.msra.mxu0 %v102
    %188 = vmatprep.subr.mxu0 %v105
    %189 = vmatpush1.msra.mxu0 %v104
    %190 = vmatprep.subr.mxu0 %v107
    %191 = vmatpush1.msra.mxu0 %v106
    %192 = vmatprep.subr.mxu0 %v109
    %193 = vmatpush1.msra.mxu0 %v108
    %194 = vmatprep.subr.mxu0 %v111
    %195 = vmatpush1.msra.mxu0 %v110
    %196 = vmatprep.subr.mxu0 %v113
    %197 = vmatpush1.msra.mxu0 %v112
    %198 = vmatprep.subr.mxu0 %v115
    %199 = vmatpush1.msra.mxu0 %v114
    %200 = vmatprep.subr.mxu0 %v117
    %201 = vmatpush1.msra.mxu0 %v116
    %202 = vmatprep.subr.mxu0 %v119
    %203 = vmatpush1.msra.mxu0 %v118
    %204 = vmatprep.subr.mxu0 %v121
    %205 = vmatpush1.msra.mxu0 %v120
    %206 = vmatprep.subr.mxu0 %v123
    %207 = vmatpush1.msra.mxu0 %v122
    %208 = vmatprep.subr.mxu0 %v125
    %209 = vmatpush1.msra.mxu0 %v124
    %210 = vmatprep.subr.mxu0 %v127
    %211 = vmatpush1.msra.mxu0 %v126
    %212 = vmatprep.subr.mxu0 %v129
    %213 = vmatpush1.msra.mxu0 %v128
    %214 = vmatprep.subr.mxu0 %v131
    %215 = vmatpush1.msra.mxu0 %v130
    %216 = vmatprep.subr.mxu0 %v133
    %217 = vmatpush1.msra.mxu0 %v132
    %218 = vmatprep.subr.mxu0 %v135
    %219 = vmatpush1.msra.mxu0 %v134
    %220 = vmatprep.subr.mxu0 %v137
    %221 = vmatpush1.msra.mxu0 %v136
    %222 = vmatprep.subr.mxu0 %v139
    %223 = vmatpush1.msra.mxu0 %v138
    %224 = vmatprep.subr.mxu0 %v141
    %225 = vmatpush1.msra.mxu0 %v140
    %226 = vmatprep.subr.mxu0 %v143
    %227 = vmatpush1.msra.mxu0 %v142
    %228 = vmatprep.subr.mxu0 %v145
    %229 = vmatpush1.msra.mxu0 %v144
    %230 = vmatprep.subr.mxu0 %v147
    %231 = vmatpush1.msra.mxu0 %v146
    %232 = vmatprep.subr.mxu0 %v149
    %233 = vmatpush1.msra.mxu0 %v148
    %234 = vmatprep.subr.mxu0 %v151
    %235 = vmatpush1.msra.mxu0 %v150
    %236 = vmatprep.subr.mxu0 %v153
    %237 = vmatpush1.msra.mxu0 %v152
    %238 = vmatprep.mubr.f32.mxu0 %v75
    %239 = vmatmul.mubr.f32.gmra.mrb[0].mxu0 %v74
    %v240 = vpop.f32.mrb[0].mxu0
    %v241 = vadd.f32 %v169, %v240
    %v242 = vpop.f32.mrb[0].mxu0
    %v243 = vadd.f32 %v173, %v242
    %244 = vmatprep.mubr.f32.mxu0 %v77
    %245 = vmatmul.mubr.f32.gmra.mrb[0].mxu0 %v76
    %v246 = vpop.f32.mrb[0].mxu0
    %v247 = vadd.f32 %v169, %v246
    %v248 = vpop.f32.mrb[0].mxu0
    %v249 = vadd.f32 %v173, %v248
    %250 = vmatprep.mubr.f32.mxu0 %v79
    %251 = vmatmul.mubr.f32.gmra.mrb[0].mxu0 %v78
    %v252 = vpop.f32.mrb[0].mxu0
    %v253 = vadd.f32 %v169, %v252
    %v254 = vpop.f32.mrb[0].mxu0
    %v255 = vadd.f32 %v173, %v254
    %256 = vmatprep.mubr.f32.mxu0 %v81
    %257 = vmatmul.mubr.f32.gmra.mrb[0].mxu0 %v80
    %v258 = vpop.f32.mrb[0].mxu0
    %v259 = vadd.f32 %v169, %v258
    %v260 = vpop.f32.mrb[0].mxu0
    %v261 = vadd.f32 %v173, %v260
    %262 = vmatprep.mubr.f32.mxu0 %v83
    %263 = vmatmul.mubr.f32.gmra.mrb[0].mxu0 %v82
    %v264 = vpop.f32.mrb[0].mxu0
    %v265 = vadd.f32 %v169, %v264
    %v266 = vpop.f32.mrb[0].mxu0
    %v267 = vadd.f32 %v173, %v266
    %268 = vmatprep.mubr.f32.mxu0 %v85
    %269 = vmatmul.mubr.f32.gmra.mrb[0].mxu0 %v84
    %v270 = vpop.f32.mrb[0].mxu0
    %v271 = vadd.f32 %v169, %v270
    %v272 = vpop.f32.mrb[0].mxu0
    %v273 = vadd.f32 %v173, %v272
    %274 = vmatprep.mubr.f32.mxu0 %v87
    %275 = vmatmul.mubr.f32.gmra.mrb[0].mxu0 %v86
    %v276 = vpop.f32.mrb[0].mxu0
    %v277 = vadd.f32 %v169, %v276
    %v278 = vpop.f32.mrb[0].mxu0
    %v279 = vadd.f32 %v173, %v278
    %280 = vmatprep.mubr.f32.mxu0 %v89
    %281 = vmatmul.mubr.f32.gmra.mrb[0].mxu0 %v88
    %v282 = vpop.f32.mrb[0].mxu0
    %v283 = vadd.f32 %v169, %v282
    %v284 = vpop.f32.mrb[0].mxu0
    %v285 = vadd.f32 %v173, %v284
    %286 = vdwg.mxu0
    %v287 = vadd.f32 %v241, %v243
    %288 = vadd.xlane.f32.xlu0 %v287
    %v289 = vpop.xlane.xlu0 %288
    %v290 = vadd.f32 %v247, %v249
    %291 = vadd.xlane.f32.xlu0 %v290
    %v292 = vpop.xlane.xlu0 %291
    %v293 = vadd.f32 %v253, %v255
    %294 = vadd.xlane.f32.xlu0 %v293
    %v295 = vpop.xlane.xlu0 %294
    %v296 = vadd.f32 %v259, %v261
    %297 = vadd.xlane.f32.xlu0 %v296
    %v298 = vpop.xlane.xlu0 %297
    %v299 = vadd.f32 %v265, %v267
    %300 = vadd.xlane.f32.xlu0 %v299
    %v301 = vpop.xlane.xlu0 %300
    %v302 = vadd.f32 %v271, %v273
    %303 = vadd.xlane.f32.xlu0 %v302
    %v304 = vpop.xlane.xlu0 %303
    %v305 = vadd.f32 %v277, %v279
    %306 = vadd.xlane.f32.xlu0 %v305
    %v307 = vpop.xlane.xlu0 %306
    %v308 = vadd.f32 %v283, %v285
    %309 = vadd.xlane.f32.xlu0 %v308
    %v310 = vpop.xlane.xlu0 %309
    %v311 = vrcp.pop 256.0
    %v312 = vmul.f32 %v289, %v311
    %v313 = vmul.f32 %v292, %v311
    %v314 = vmul.f32 %v295, %v311
    %v315 = vmul.f32 %v298, %v311
    %v316 = vmul.f32 %v301, %v311
    %v317 = vmul.f32 %v304, %v311
    %v318 = vmul.f32 %v307, %v311
    %v319 = vmul.f32 %v310, %v311
    %v320 = vsub.f32 %v241, %v312
    %v321 = vsub.f32 %v243, %v312
    %v322 = vsub.f32 %v247, %v313
    %v323 = vsub.f32 %v249, %v313
    %v324 = vsub.f32 %v253, %v314
    %v325 = vsub.f32 %v255, %v314
    %v326 = vsub.f32 %v259, %v315
    %v327 = vsub.f32 %v261, %v315
    %v328 = vsub.f32 %v265, %v316
    %v329 = vsub.f32 %v267, %v316
    %v330 = vsub.f32 %v271, %v317
    %v331 = vsub.f32 %v273, %v317
    %v332 = vsub.f32 %v277, %v318
    %v333 = vsub.f32 %v279, %v318
    %v334 = vsub.f32 %v283, %v319
    %v335 = vsub.f32 %v285, %v319
    %v336 = vmul.f32 %v320, %v320
    %v337 = vmul.f32 %v321, %v321
    %v338 = vmul.f32 %v322, %v322
    %v339 = vmul.f32 %v323, %v323
    %v340 = vmul.f32 %v324, %v324
    %v341 = vmul.f32 %v325, %v325
    %v342 = vmul.f32 %v326, %v326
    %v343 = vmul.f32 %v327, %v327
    %v344 = vmul.f32 %v328, %v328
    %v345 = vmul.f32 %v329, %v329
    %v346 = vmul.f32 %v330, %v330
    %v347 = vmul.f32 %v331, %v331
    %v348 = vmul.f32 %v332, %v332
    %v349 = vmul.f32 %v333, %v333
    %v350 = vmul.f32 %v334, %v334
    %v351 = vmul.f32 %v335, %v335
    %v352 = vadd.f32 %v336, %v337
    %353 = vadd.xlane.f32.xlu0 %v352
    %v354 = vpop.xlane.xlu0 %353
    %v355 = vadd.f32 %v338, %v339
    %356 = vadd.xlane.f32.xlu0 %v355
    %v357 = vpop.xlane.xlu0 %356
    %v358 = vadd.f32 %v340, %v341
    %359 = vadd.xlane.f32.xlu0 %v358
    %v360 = vpop.xlane.xlu0 %359
    %v361 = vadd.f32 %v342, %v343
    %362 = vadd.xlane.f32.xlu0 %v361
    %v363 = vpop.xlane.xlu0 %362
    %v364 = vadd.f32 %v344, %v345
    %365 = vadd.xlane.f32.xlu0 %v364
    %v366 = vpop.xlane.xlu0 %365
    %v367 = vadd.f32 %v346, %v347
    %368 = vadd.xlane.f32.xlu0 %v367
    %v369 = vpop.xlane.xlu0 %368
    %v370 = vadd.f32 %v348, %v349
    %371 = vadd.xlane.f32.xlu0 %v370
    %v372 = vpop.xlane.xlu0 %371
    %v373 = vadd.f32 %v350, %v351
    %374 = vadd.xlane.f32.xlu0 %v373
    %v375 = vpop.xlane.xlu0 %374
    %v376 = vmul.f32 %v354, %v311
    %v377 = vmul.f32 %v357, %v311
    %v378 = vmul.f32 %v360, %v311
    %v379 = vmul.f32 %v363, %v311
    %v380 = vmul.f32 %v366, %v311
    %v381 = vmul.f32 %v369, %v311
    %v382 = vmul.f32 %v372, %v311
    %v383 = vmul.f32 %v375, %v311
    %v384 = vadd.f32 %v376, 1e-05
    %v385 = vadd.f32 %v377, 1e-05
    %v386 = vadd.f32 %v378, 1e-05
    %v387 = vadd.f32 %v379, 1e-05
    %v388 = vadd.f32 %v380, 1e-05
    %v389 = vadd.f32 %v381, 1e-05
    %v390 = vadd.f32 %v382, 1e-05
    %v391 = vadd.f32 %v383, 1e-05
    %v392 = vrsqrt.pop %v384
    %v393 = vrsqrt.pop %v385
    %v394 = vrsqrt.pop %v386
    %v395 = vrsqrt.pop %v387
    %v396 = vrsqrt.pop %v388
    %v397 = vrsqrt.pop %v389
    %v398 = vrsqrt.pop %v390
    %v399 = vrsqrt.pop %v391
    %v400 = vmul.f32 %v320, %v392
    %v401 = vmul.f32 %v321, %v392
    %v402 = vmul.f32 %v322, %v393
    %v403 = vmul.f32 %v323, %v393
    %v404 = vmul.f32 %v324, %v394
    %v405 = vmul.f32 %v325, %v394
    %v406 = vmul.f32 %v326, %v395
    %v407 = vmul.f32 %v327, %v395
    %v408 = vmul.f32 %v328, %v396
    %v409 = vmul.f32 %v329, %v396
    %v410 = vmul.f32 %v330, %v397
    %v411 = vmul.f32 %v331, %v397
    %v412 = vmul.f32 %v332, %v398
    %v413 = vmul.f32 %v333, %v398
    %v414 = vmul.f32 %v334, %v399
    %v415 = vmul.f32 %v335, %v399
    %v416 = vlaneseq
    %v417 = vshrl.u32 %v416, 7
    %v418 = vsub.s32 1, %v417
    %v419 = vrot.slane %v154, %v418
    %v420 = vlaneseq
    %v421 = vshrl.u32 %v420, 7
    %v422 = vsub.s32 5, %v421
    %v423 = vrot.slane %v154, %v422
    %v426 = vlaneseq
    %v427 = vshrl.u32 %v426, 7
    %v428 = vsub.s32 1, %v427
    %v429 = vrot.slane %v419, %v428
    %v430 = vlaneseq
    %v431 = vshrl.u32 %v430, 7
    %v432 = vsub.s32 1, %v431
    %v433 = vrot.slane %v423, %v432
    %v434 = vmul.f32 %v400, %v429
    %v435 = vmul.f32 %v401, %v433
    %v436 = vmul.f32 %v402, %v429
    %v437 = vmul.f32 %v403, %v433
    %v438 = vmul.f32 %v404, %v429
    %v439 = vmul.f32 %v405, %v433
    %v440 = vmul.f32 %v406, %v429
    %v441 = vmul.f32 %v407, %v433
    %v442 = vmul.f32 %v408, %v429
    %v443 = vmul.f32 %v409, %v433
    %v444 = vmul.f32 %v410, %v429
    %v445 = vmul.f32 %v411, %v433
    %v446 = vmul.f32 %v412, %v429
    %v447 = vmul.f32 %v413, %v433
    %v448 = vmul.f32 %v414, %v429
    %v449 = vmul.f32 %v415, %v433
    %v450 = vlaneseq
    %v451 = vshrl.u32 %v450, 7
    %v452 = vsub.s32 2, %v451
    %v453 = vrot.slane %v154, %v452
    %v454 = vlaneseq
    %v455 = vshrl.u32 %v454, 7
    %v456 = vsub.s32 6, %v455
    %v457 = vrot.slane %v154, %v456
    %v460 = vlaneseq
    %v461 = vshrl.u32 %v460, 7
    %v462 = vsub.s32 2, %v461
    %v463 = vrot.slane %v453, %v462
    %v464 = vlaneseq
    %v465 = vshrl.u32 %v464, 7
    %v466 = vsub.s32 2, %v465
    %v467 = vrot.slane %v457, %v466
    %v468 = vadd.f32 %v434, %v463
    %v469 = vadd.f32 %v435, %v467
    %v470 = vadd.f32 %v436, %v463
    %v471 = vadd.f32 %v437, %v467
    %v472 = vadd.f32 %v438, %v463
    %v473 = vadd.f32 %v439, %v467
    %v474 = vadd.f32 %v440, %v463
    %v475 = vadd.f32 %v441, %v467
    %v476 = vadd.f32 %v442, %v463
    %v477 = vadd.f32 %v443, %v467
    %v478 = vadd.f32 %v444, %v463
    %v479 = vadd.f32 %v445, %v467
    %v480 = vadd.f32 %v446, %v463
    %v481 = vadd.f32 %v447, %v467
    %v482 = vadd.f32 %v448, %v463
    %v483 = vadd.f32 %v449, %v467
    %v484 = vmul.f32 %v468, 0.2
    %v485 = vmul.f32 %v469, 0.2
    %v486 = vmul.f32 %v470, 0.2
    %v487 = vmul.f32 %v471, 0.2
    %v488 = vmul.f32 %v472, 0.2
    %v489 = vmul.f32 %v473, 0.2
    %v490 = vmul.f32 %v474, 0.2
    %v491 = vmul.f32 %v475, 0.2
    %v492 = vmul.f32 %v476, 0.2
    %v493 = vmul.f32 %v477, 0.2
    %v494 = vmul.f32 %v478, 0.2
    %v495 = vmul.f32 %v479, 0.2
    %v496 = vmul.f32 %v480, 0.2
    %v497 = vmul.f32 %v481, 0.2
    %v498 = vmul.f32 %v482, 0.2
    %v499 = vmul.f32 %v483, 0.2
    %v500 = vmax.f32 %v468, %v484
    %v501 = vmax.f32 %v469, %v485
    %v502 = vmax.f32 %v470, %v486
    %v503 = vmax.f32 %v471, %v487
    %v504 = vmax.f32 %v472, %v488
    %v505 = vmax.f32 %v473, %v489
    %v506 = vmax.f32 %v474, %v490
    %v507 = vmax.f32 %v475, %v491
    %v508 = vmax.f32 %v476, %v492
    %v509 = vmax.f32 %v477, %v493
    %v510 = vmax.f32 %v478, %v494
    %v511 = vmax.f32 %v479, %v495
    %v512 = vmax.f32 %v480, %v496
    %v513 = vmax.f32 %v481, %v497
    %v514 = vmax.f32 %v482, %v498
    %v515 = vmax.f32 %v483, %v499
    %v516 = vld [vmem:[#allocation8] sm:$0xff]
    %v517 = vld [vmem:[#allocation8 + $0x8] sm:$0xff]
    %v518 = vld [vmem:[#allocation8 + $0x10] sm:$0xff]
    %v519 = vld [vmem:[#allocation8 + $0x18] sm:$0xff]
    %v520 = vld [vmem:[#allocation8 + $0x20] sm:$0xff]
    %v521 = vld [vmem:[#allocation8 + $0x28] sm:$0xff]
    %v522 = vld [vmem:[#allocation8 + $0x30] sm:$0xff]
    %v523 = vld [vmem:[#allocation8 + $0x38] sm:$0xff]
    %v524 = vld [vmem:[#allocation8 + $0x40] sm:$0xff]
    %v525 = vld [vmem:[#allocation8 + $0x48] sm:$0xff]
    %v526 = vld [vmem:[#allocation8 + $0x50] sm:$0xff]
    %v527 = vld [vmem:[#allocation8 + $0x58] sm:$0xff]
    %v528 = vld [vmem:[#allocation8 + $0x60] sm:$0xff]
    %v529 = vld [vmem:[#allocation8 + $0x68] sm:$0xff]
    %v530 = vld [vmem:[#allocation8 + $0x70] sm:$0xff]
    %v531 = vld [vmem:[#allocation8 + $0x78] sm:$0xff]
    %v532 = vld [vmem:[#allocation8 + $0x80] sm:$0xff]
    %v533 = vld [vmem:[#allocation8 + $0x88] sm:$0xff]
    %v534 = vld [vmem:[#allocation8 + $0x90] sm:$0xff]
    %v535 = vld [vmem:[#allocation8 + $0x98] sm:$0xff]
    %v536 = vld [vmem:[#allocation8 + $0xa0] sm:$0xff]
    %v537 = vld [vmem:[#allocation8 + $0xa8] sm:$0xff]
    %v538 = vld [vmem:[#allocation8 + $0xb0] sm:$0xff]
    %v539 = vld [vmem:[#allocation8 + $0xb8] sm:$0xff]
    %v540 = vld [vmem:[#allocation8 + $0xc0] sm:$0xff]
    %v541 = vld [vmem:[#allocation8 + $0xc8] sm:$0xff]
    %v542 = vld [vmem:[#allocation8 + $0xd0] sm:$0xff]
    %v543 = vld [vmem:[#allocation8 + $0xd8] sm:$0xff]
    %v544 = vld [vmem:[#allocation8 + $0xe0] sm:$0xff]
    %v545 = vld [vmem:[#allocation8 + $0xe8] sm:$0xff]
    %v546 = vld [vmem:[#allocation8 + $0xf0] sm:$0xff]
    %v547 = vld [vmem:[#allocation8 + $0xf8] sm:$0xff]
    %v548 = vld [vmem:[%s4] sm:$0x7]
    %v549 = vlaneseq
    %v550 = vshrl.u32 %v549, 7
    %v551 = vsub.s32 0, %v550
    %v552 = vrot.slane %v548, %v551
    %553 = vmatprep.subr.mxu0 0.0
    %554 = vmatpush1.msra.mxu0 %v516
    %555 = vmatprep.subr.mxu0 0.0
    %556 = vmatpush1.msra.mxu0 %v517
    %557 = vmatprep.subr.mxu0 0.0
    %558 = vmatpush1.msra.mxu0 %v518
    %559 = vmatprep.subr.mxu0 0.0
    %560 = vmatpush1.msra.mxu0 %v519
    %561 = vmatprep.subr.mxu0 0.0
    %562 = vmatpush1.msra.mxu0 %v520
    %563 = vmatprep.subr.mxu0 0.0
    %564 = vmatpush1.msra.mxu0 %v521
    %565 = vmatprep.subr.mxu0 0.0
    %566 = vmatpush1.msra.mxu0 %v522
    %567 = vmatprep.subr.mxu0 0.0
    %568 = vmatpush1.msra.mxu0 %v523
    %569 = vmatprep.subr.mxu0 0.0
    %570 = vmatpush1.msra.mxu0 %v524
    %571 = vmatprep.subr.mxu0 0.0
    %572 = vmatpush1.msra.mxu0 %v525
    %573 = vmatprep.subr.mxu0 0.0
    %574 = vmatpush1.msra.mxu0 %v526
    %575 = vmatprep.subr.mxu0 0.0
    %576 = vmatpush1.msra.mxu0 %v527
    %577 = vmatprep.subr.mxu0 0.0
    %578 = vmatpush1.msra.mxu0 %v528
    %579 = vmatprep.subr.mxu0 0.0
    %580 = vmatpush1.msra.mxu0 %v529
    %581 = vmatprep.subr.mxu0 0.0
    %582 = vmatpush1.msra.mxu0 %v530
    %583 = vmatprep.subr.mxu0 0.0
    %584 = vmatpush1.msra.mxu0 %v531
    %585 = vmatprep.subr.mxu0 0.0
    %586 = vmatpush1.msra.mxu0 %v532
    %587 = vmatprep.subr.mxu0 0.0
    %588 = vmatpush1.msra.mxu0 %v533
    %589 = vmatprep.subr.mxu0 0.0
    %590 = vmatpush1.msra.mxu0 %v534
    %591 = vmatprep.subr.mxu0 0.0
    %592 = vmatpush1.msra.mxu0 %v535
    %593 = vmatprep.subr.mxu0 0.0
    %594 = vmatpush1.msra.mxu0 %v536
    %595 = vmatprep.subr.mxu0 0.0
    %596 = vmatpush1.msra.mxu0 %v537
    %597 = vmatprep.subr.mxu0 0.0
    %598 = vmatpush1.msra.mxu0 %v538
    %599 = vmatprep.subr.mxu0 0.0
    %600 = vmatpush1.msra.mxu0 %v539
    %601 = vmatprep.subr.mxu0 0.0
    %602 = vmatpush1.msra.mxu0 %v540
    %603 = vmatprep.subr.mxu0 0.0
    %604 = vmatpush1.msra.mxu0 %v541
    %605 = vmatprep.subr.mxu0 0.0
    %606 = vmatpush1.msra.mxu0 %v542
    %607 = vmatprep.subr.mxu0 0.0
    %608 = vmatpush1.msra.mxu0 %v543
    %609 = vmatprep.subr.mxu0 0.0
    %610 = vmatpush1.msra.mxu0 %v544
    %611 = vmatprep.subr.mxu0 0.0
    %612 = vmatpush1.msra.mxu0 %v545
    %613 = vmatprep.subr.mxu0 0.0
    %614 = vmatpush1.msra.mxu0 %v546
    %615 = vmatprep.subr.mxu0 0.0
    %616 = vmatpush1.msra.mxu0 %v547
    %617 = vmatprep.mubr.f32.mxu0 %v501
    %618 = vmatmul.mubr.f32.gmra.mrb[0].mxu0 %v500
    %v619 = vpop.f32.mrb[0].mxu0
    %v620 = vadd.f32 %v552, %v619
    %v621 = vpop.f32.mrb[0].mxu0
    %622 = vmatprep.mubr.f32.mxu0 %v503
    %623 = vmatmul.mubr.f32.gmra.mrb[0].mxu0 %v502
    %v624 = vpop.f32.mrb[0].mxu0
    %v625 = vadd.f32 %v552, %v624
    %v626 = vpop.f32.mrb[0].mxu0
    %627 = vmatprep.mubr.f32.mxu0 %v505
    %628 = vmatmul.mubr.f32.gmra.mrb[0].mxu0 %v504
    %v629 = vpop.f32.mrb[0].mxu0
    %v630 = vadd.f32 %v552, %v629
    %v631 = vpop.f32.mrb[0].mxu0
    %632 = vmatprep.mubr.f32.mxu0 %v507
    %633 = vmatmul.mubr.f32.gmra.mrb[0].mxu0 %v506
    %v634 = vpop.f32.mrb[0].mxu0
    %v635 = vadd.f32 %v552, %v634
    %v636 = vpop.f32.mrb[0].mxu0
    %637 = vmatprep.mubr.f32.mxu0 %v509
    %638 = vmatmul.mubr.f32.gmra.mrb[0].mxu0 %v508
    %v639 = vpop.f32.mrb[0].mxu0
    %v640 = vadd.f32 %v552, %v639
    %v641 = vpop.f32.mrb[0].mxu0
    %642 = vmatprep.mubr.f32.mxu0 %v511
    %643 = vmatmul.mubr.f32.gmra.mrb[0].mxu0 %v510
    %v644 = vpop.f32.mrb[0].mxu0
    %v645 = vadd.f32 %v552, %v644
    %v646 = vpop.f32.mrb[0].mxu0
    %647 = vmatprep.mubr.f32.mxu0 %v513
    %648 = vmatmul.mubr.f32.gmra.mrb[0].mxu0 %v512
    %v649 = vpop.f32.mrb[0].mxu0
    %v650 = vadd.f32 %v552, %v649
    %v651 = vpop.f32.mrb[0].mxu0
    %652 = vmatprep.mubr.f32.mxu0 %v515
    %653 = vmatmul.mubr.f32.gmra.mrb[0].mxu0 %v514
    %v654 = vpop.f32.mrb[0].mxu0
    %v655 = vadd.f32 %v552, %v654
    %v656 = vpop.f32.mrb[0].mxu0
    %657 = vdwg.mxu0
    %658 = vadd.xlane.f32.xlu0 %v620
    %v659 = vpop.xlane.xlu0 %658
    %660 = vadd.xlane.f32.xlu0 %v625
    %v661 = vpop.xlane.xlu0 %660
    %662 = vadd.xlane.f32.xlu0 %v630
    %v663 = vpop.xlane.xlu0 %662
    %664 = vadd.xlane.f32.xlu0 %v635
    %v665 = vpop.xlane.xlu0 %664
    %666 = vadd.xlane.f32.xlu0 %v640
    %v667 = vpop.xlane.xlu0 %666
    %668 = vadd.xlane.f32.xlu0 %v645
    %v669 = vpop.xlane.xlu0 %668
    %670 = vadd.xlane.f32.xlu0 %v650
    %v671 = vpop.xlane.xlu0 %670
    %672 = vadd.xlane.f32.xlu0 %v655
    %v673 = vpop.xlane.xlu0 %672
    %v674 = vrcp.pop 128.0
    %v675 = vmul.f32 %v659, %v674
    %v676 = vmul.f32 %v661, %v674
    %v677 = vmul.f32 %v663, %v674
    %v678 = vmul.f32 %v665, %v674
    %v679 = vmul.f32 %v667, %v674
    %v680 = vmul.f32 %v669, %v674
    %v681 = vmul.f32 %v671, %v674
    %v682 = vmul.f32 %v673, %v674
    %v683 = vsub.f32 %v620, %v675
    %v684 = vsub.f32 %v625, %v676
    %v685 = vsub.f32 %v630, %v677
    %v686 = vsub.f32 %v635, %v678
    %v687 = vsub.f32 %v640, %v679
    %v688 = vsub.f32 %v645, %v680
    %v689 = vsub.f32 %v650, %v681
    %v690 = vsub.f32 %v655, %v682
    %v691 = vmul.f32 %v683, %v683
    %v692 = vmul.f32 %v684, %v684
    %v693 = vmul.f32 %v685, %v685
    %v694 = vmul.f32 %v686, %v686
    %v695 = vmul.f32 %v687, %v687
    %v696 = vmul.f32 %v688, %v688
    %v697 = vmul.f32 %v689, %v689
    %v698 = vmul.f32 %v690, %v690
    %699 = vadd.xlane.f32.xlu0 %v691
    %v700 = vpop.xlane.xlu0 %699
    %701 = vadd.xlane.f32.xlu0 %v692
    %v702 = vpop.xlane.xlu0 %701
    %703 = vadd.xlane.f32.xlu0 %v693
    %v704 = vpop.xlane.xlu0 %703
    %705 = vadd.xlane.f32.xlu0 %v694
    %v706 = vpop.xlane.xlu0 %705
    %707 = vadd.xlane.f32.xlu0 %v695
    %v708 = vpop.xlane.xlu0 %707
    %709 = vadd.xlane.f32.xlu0 %v696
    %v710 = vpop.xlane.xlu0 %709
    %711 = vadd.xlane.f32.xlu0 %v697
    %v712 = vpop.xlane.xlu0 %711
    %713 = vadd.xlane.f32.xlu0 %v698
    %v714 = vpop.xlane.xlu0 %713
    %v715 = vmul.f32 %v700, %v674
    %v716 = vmul.f32 %v702, %v674
    %v717 = vmul.f32 %v704, %v674
    %v718 = vmul.f32 %v706, %v674
    %v719 = vmul.f32 %v708, %v674
    %v720 = vmul.f32 %v710, %v674
    %v721 = vmul.f32 %v712, %v674
    %v722 = vmul.f32 %v714, %v674
    %v723 = vadd.f32 %v715, 1e-05
    %v724 = vadd.f32 %v716, 1e-05
    %v725 = vadd.f32 %v717, 1e-05
    %v726 = vadd.f32 %v718, 1e-05
    %v727 = vadd.f32 %v719, 1e-05
    %v728 = vadd.f32 %v720, 1e-05
    %v729 = vadd.f32 %v721, 1e-05
    %v730 = vadd.f32 %v722, 1e-05
    %v731 = vrsqrt.pop %v723
    %v732 = vrsqrt.pop %v724
    %v733 = vrsqrt.pop %v725
    %v734 = vrsqrt.pop %v726
    %v735 = vrsqrt.pop %v727
    %v736 = vrsqrt.pop %v728
    %v737 = vrsqrt.pop %v729
    %v738 = vrsqrt.pop %v730
    %v739 = vmul.f32 %v683, %v731
    %v740 = vmul.f32 %v684, %v732
    %v741 = vmul.f32 %v685, %v733
    %v742 = vmul.f32 %v686, %v734
    %v743 = vmul.f32 %v687, %v735
    %v744 = vmul.f32 %v688, %v736
    %v745 = vmul.f32 %v689, %v737
    %v746 = vmul.f32 %v690, %v738
    %v747 = vlaneseq
    %v748 = vshrl.u32 %v747, 7
    %v749 = vsub.s32 1, %v748
    %v750 = vrot.slane %v548, %v749
    %v751 = vmul.f32 %v739, %v750
    %v752 = vmul.f32 %v740, %v750
    %v753 = vmul.f32 %v741, %v750
    %v754 = vmul.f32 %v742, %v750
    %v755 = vmul.f32 %v743, %v750
    %v756 = vmul.f32 %v744, %v750
    %v757 = vmul.f32 %v745, %v750
    %v758 = vmul.f32 %v746, %v750
    %v759 = vlaneseq
    %v760 = vshrl.u32 %v759, 7
    %v761 = vsub.s32 2, %v760
    %v762 = vrot.slane %v548, %v761
    %v763 = vadd.f32 %v751, %v762
    %v764 = vadd.f32 %v752, %v762
    %v765 = vadd.f32 %v753, %v762
    %v766 = vadd.f32 %v754, %v762
    %v767 = vadd.f32 %v755, %v762
    %v768 = vadd.f32 %v756, %v762
    %v769 = vadd.f32 %v757, %v762
    %v770 = vadd.f32 %v758, %v762
    %771 = vst [vmem:[#allocation10] sm:$0xff] %v763
    %772 = vst [vmem:[#allocation10 + $0x8] sm:$0xff] %v764
    %773 = vst [vmem:[#allocation10 + $0x10] sm:$0xff] %v765
    %774 = vst [vmem:[#allocation10 + $0x18] sm:$0xff] %v766
    %775 = vst [vmem:[#allocation10 + $0x20] sm:$0xff] %v767
    %776 = vst [vmem:[#allocation10 + $0x28] sm:$0xff] %v768
    %777 = vst [vmem:[#allocation10 + $0x30] sm:$0xff] %v769
    %778 = vst [vmem:[#allocation10 + $0x38] sm:$0xff] %v770
    // Predicated region
    $region38: #{tpu_custom_call.1} parent=1 // pred_check
      _
    $region39: #{tpu_custom_call.1} parent=1 // pred_check_branch
      %780 = sbr.rel (0) target = $region41
    $region40: #{tpu_custom_call.1} parent=1 // pred_region
      %s782 = ssub.s32 1024, 1024
      %783 = vsyncadd [#allocation4], %s782
      %s784 = sshll.u32 [#allocation10], 4
      %s785 = int_to_ptr.vmem [resolvable:$true] %s784
      %790 = dma.vmem_to_hbm [thread:$0]  %s785, 1024, %s5, [#allocation4], 128, 128, 8
    $region41: #{tpu_custom_call.1} parent=1 // pred_fallthru
      _
    // Predicated region
    $region42: #{tpu_custom_call.1} parent=1 // pred_check
      _
    $region43: #{tpu_custom_call.1} parent=1 // pred_check_branch
      %792 = sbr.rel (0) target = $region45
    $region44: #{tpu_custom_call.1} parent=1 // pred_region
      %793 = dma.done [#allocation4], 1024
    $region45: #{tpu_custom_call.1} parent=1 // pred_fallthru
      _
    %794 = vsyncpa [#allocation3], 1
    %795 = vsyncpa [#allocation6], 1
    %796 = vsyncpa [#allocation9], 1
    %797 = vsyncpa [#allocation4], 1

</llo_original>
